<compile_context>
chip_gen: v5e
topology: v5e:2x2
jax: 0.10.0
libtpu: 0.0.40
codegen_flags: <defaults>
</compile_context>

<pallas_src>
import functools

import jax
import jax.numpy as jnp
from jax.experimental import pallas as pl
from jax.experimental.pallas import tpu as pltpu


# --------------------------------------------------------------------------
# Kronecker effective weight (per-parameter, batch-independent) -- plain XLA.
# --------------------------------------------------------------------------
def kron_effective_weight(a, s, b):
    """W_eff = sum_r kron(s*A_r, B_r), shape (a1*b1, a2*b2)."""
    rank, a1, a2 = a.shape
    _, b1, b2 = b.shape
    a_eff = a * s[None]                              # structured-sparse gate
    w = jnp.einsum("rij,rkl->ikjl", a_eff, b)        # rank contraction
    return w.reshape(a1 * b1, a2 * b2)


# --------------------------------------------------------------------------
# Fused forward kernel:  y = sigmoid(x @ W_packed + b_packed)
#   x_ref : (tb, in_f)          one batch tile
#   w_ref : (in_f, packed_cols) both layers' weights, lane-dense padded
#   b_ref : (1, packed_cols)    both layers' biases,  lane-dense padded
#   y_ref : (tb, packed_cols)   lane-dense output (unmasked vst)
# --------------------------------------------------------------------------
def _fused_forward_kernel(x_ref, w_ref, b_ref, y_ref):
    h = jnp.dot(x_ref[...], w_ref[...],
                preferred_element_type=jnp.float32) + b_ref[...]
    # sigmoid: exp and approximate reciprocal both run on the EUP slot.
    y_ref[...] = pl.reciprocal(1.0 + jnp.exp(-h), approx=True)


def one_layer_forward(x, params, *, block_batch=256):
    n = x.shape[0]
    x_flat = x.reshape(n, -1).astype(jnp.float32)    # == x.view(-1, 784)
    in_f = x_flat.shape[1]

    # Effective weights for both KronLinear layers (tiny, XLA-fused).
    w1 = kron_effective_weight(params["a1"], params["s1"], params["b1"])
    w2 = kron_effective_weight(params["a2"], params["s2"], params["b2"])
    out1, out2 = w1.shape[1], w2.shape[1]

    # Pack both weight matrices / biases column-wise, zero-pad to 128 lanes.
    lanes = 128
    packed_cols = max(lanes, pl.cdiv(out1 + out2, lanes) * lanes)
    w_packed = jnp.zeros((in_f, packed_cols), jnp.float32)
    w_packed = w_packed.at[:, :out1].set(w1)
    w_packed = w_packed.at[:, out1:out1 + out2].set(w2)
    b_packed = jnp.zeros((1, packed_cols), jnp.float32)
    b_packed = b_packed.at[0, :out1].set(params["bias1"].astype(jnp.float32))
    b_packed = b_packed.at[0, out1:out1 + out2].set(params["bias2"].astype(jnp.float32))

    # Batch tiling: multiple of 8 sublanes, capped so tiles stay VMEM-friendly
    # on v7x (64 MiB/TC).  Pad batch up to a whole number of tiles.
    tb = min(block_batch, max(8, ((n + 7) // 8) * 8))
    n_pad = pl.cdiv(n, tb) * tb
    if n_pad != n:
        x_flat = jnp.pad(x_flat, ((0, n_pad - n), (0, 0)))

    y = pl.pallas_call(
        _fused_forward_kernel,
        out_shape=jax.ShapeDtypeStruct((n_pad, packed_cols), jnp.float32),
        grid=(n_pad // tb,),
        in_specs=[
            pl.BlockSpec((tb, in_f), lambda i: (i, 0)),            # x tile
            pl.BlockSpec((in_f, packed_cols), lambda i: (0, 0)),   # VMEM-resident W
            pl.BlockSpec((1, packed_cols), lambda i: (0, 0)),      # VMEM-resident bias
        ],
        out_specs=pl.BlockSpec((tb, packed_cols), lambda i: (i, 0)),
        compiler_params=pltpu.CompilerParams(
            dimension_semantics=("parallel",)),                    # megacore on v7x
    )(x_flat, w_packed, b_packed)

    y1 = y[:n, :out1]
    y2 = y[:n, out1:out1 + out2]
    return y1, y2


# --------------------------------------------------------------------------
# Deterministic parameter init (matches the constructor shapes)
# --------------------------------------------------------------------------
def init_params(key, in_f=784, out_f=10, rank=20):
    def kron_params(k, patch):
        a1, a2 = patch
        b1, b2 = in_f // a1, out_f // a2
        k1, k2, k3 = jax.random.split(k, 3)
        a = 0.1 * jax.random.normal(k1, (rank, a1, a2), jnp.float32)
        b = 0.1 * jax.random.normal(k2, (rank, b1, b2), jnp.float32)
        s = jax.random.normal(k3, (a1, a2), jnp.float32)   # structured-sparse gate
        bias = jnp.zeros((out_f,), jnp.float32)            # zero-init bias
        return a, s, b, bias

    k1, k2 = jax.random.split(key)
    a1_, s1_, b1_, bias1_ = kron_params(k1, (49, 2))   # KronLinear(784,10,(49,2),rank=20)
    a2_, s2_, b2_, bias2_ = kron_params(k2, (2, 10))   # KronLinear(784,10,(2,10),rank=20)
    return dict(a1=a1_, s1=s1_, b1=b1_, bias1=bias1_,
                a2=a2_, s2=s2_, b2=b2_, bias2=bias2_)


# --------------------------------------------------------------------------
# Pure-JAX reference (numerical sanity check)
# --------------------------------------------------------------------------
def _reference(x, params):
    xf = x.reshape(x.shape[0], -1)
    w1 = kron_effective_weight(params["a1"], params["s1"], params["b1"])
    w2 = kron_effective_weight(params["a2"], params["s2"], params["b2"])
    y1 = jax.nn.sigmoid(xf @ w1 + params["bias1"])
    y2 = jax.nn.sigmoid(xf @ w2 + params["bias2"])
    return y1, y2


if __name__ == "__main__":
    key = jax.random.PRNGKey(0)
    kx, kp = jax.random.split(key)
    x = jax.random.normal(kx, (8, 1, 28, 28), jnp.float32)   # MNIST-like small batch
    params = init_params(kp)

    forward = jax.jit(functools.partial(one_layer_forward, block_batch=256))
    y1, y2 = forward(x, params)
    y1, y2 = jax.block_until_ready((y1, y2))

    r1, r2 = _reference(x, params)
    assert y1.shape == (8, 10) and y2.shape == (8, 10)
    # approx=True reciprocal is ~bf16-accurate; sigmoid output error << 1e-2.
    assert jnp.allclose(y1, r1, atol=1e-2, rtol=1e-2)
    assert jnp.allclose(y2, r2, atol=1e-2, rtol=1e-2)
    print("KERNEL_OK")
</pallas_src>

<mosaic_0001>
module attributes {stable_mosaic.version = 11 : i64} {
  func.func @_fused_forward_kernel(%arg0: i32, %arg1: memref<8x784xf32, #tpu.memory_space<vmem>>, %arg2: memref<784x128xf32, #tpu.memory_space<vmem>>, %arg3: memref<1x128xf32, #tpu.memory_space<vmem>>, %arg4: memref<8x128xf32, #tpu.memory_space<vmem>>) attributes {dimension_semantics = [#tpu.dimension_semantics<parallel>], iteration_bounds = array<i64: 1>, scalar_prefetch = 0 : i64, scratch_operands = 0 : i64, tpu.core_type = #tpu.core_type<tc>, window_params = [{transform_indices = @transform_0, window_bounds = array<i64: 8, 784>}, {pipeline_mode = #tpu.pipeline_mode<synchronous>, transform_indices = @transform_1, window_bounds = array<i64: 784, 128>}, {pipeline_mode = #tpu.pipeline_mode<synchronous>, transform_indices = @transform_2, window_bounds = array<i64: 1, 128>}, {transform_indices = @transform_3, window_bounds = array<i64: 8, 128>}]} {
    %c0 = arith.constant 0 : index
    %c0_0 = arith.constant 0 : index
    %0 = vector.load %arg1[%c0, %c0_0] : memref<8x784xf32, #tpu.memory_space<vmem>>, vector<8x784xf32>
    %c0_1 = arith.constant 0 : index
    %c0_2 = arith.constant 0 : index
    %1 = vector.load %arg2[%c0_1, %c0_2] : memref<784x128xf32, #tpu.memory_space<vmem>>, vector<784x128xf32>
    %cst = arith.constant dense<0.000000e+00> : vector<8x128xf32>
    %2 = tpu.matmul %0, %1, %cst {dimension_numbers = #tpu.dot_dimension_numbers<[1], [0], [0], [1], [0, 0, 1, 1], [], []>} : vector<8x784xf32>, vector<784x128xf32>, vector<8x128xf32> -> vector<8x128xf32>
    %c0_3 = arith.constant 0 : index
    %c0_4 = arith.constant 0 : index
    %3 = vector.load %arg3[%c0_3, %c0_4] : memref<1x128xf32, #tpu.memory_space<vmem>>, vector<1x128xf32>
    %4 = vector.broadcast %3 : vector<1x128xf32> to vector<8x128xf32>
    %5 = arith.addf %2, %4 : vector<8x128xf32>
    %cst_5 = arith.constant 0.000000e+00 : f32
    %6 = vector.broadcast %cst_5 : f32 to vector<8x128xf32>
    %7 = arith.subf %6, %5 : vector<8x128xf32>
    %8 = math.exp %7 : vector<8x128xf32>
    %cst_6 = arith.constant 1.000000e+00 : f32
    %9 = vector.broadcast %cst_6 : f32 to vector<8x128xf32>
    %10 = arith.addf %9, %8 : vector<8x128xf32>
    %11 = tpu.reciprocal %10 {approx = true} : vector<8x128xf32> -> vector<8x128xf32>
    %c0_7 = arith.constant 0 : index
    %c0_8 = arith.constant 0 : index
    %12 = vector.load %arg4[%c0_7, %c0_8] : memref<8x128xf32, #tpu.memory_space<vmem>>, vector<8x128xf32>
    tpu.vector_store %arg4[%c0_7, %c0_8], %11 {strides = array<i32>} : memref<8x128xf32, #tpu.memory_space<vmem>>, vector<8x128xf32>,
    return
  }
  func.func @transform_0(%arg0: i32) -> (i32, i32) {
    %c0_i32 = arith.constant 0 : i32
    %c0_i32_0 = arith.constant 0 : i32
    return %arg0, %c0_i32 : i32, i32
  }
  func.func @transform_1(%arg0: i32) -> (i32, i32) {
    %c0_i32 = arith.constant 0 : i32
    %c0_i32_0 = arith.constant 0 : i32
    %c0_i32_1 = arith.constant 0 : i32
    return %c0_i32, %c0_i32_0 : i32, i32
  }
  func.func @transform_2(%arg0: i32) -> (i32, i32) {
    %c0_i32 = arith.constant 0 : i32
    %c0_i32_0 = arith.constant 0 : i32
    %c0_i32_1 = arith.constant 0 : i32
    return %c0_i32, %c0_i32_0 : i32, i32
  }
  func.func @transform_3(%arg0: i32) -> (i32, i32) {
    %c0_i32 = arith.constant 0 : i32
    %c0_i32_0 = arith.constant 0 : i32
    return %arg0, %c0_i32 : i32, i32
  }
}

</mosaic_0001>

<llo_original>
// kernel: one_layer_forward.1
$region0: #{one_layer_forward.1}
  #allocation0 [shape = 'u32[]', space=smem, size = 0x4, offset = 0x4, fixed_abs, tag = 'smem constant byte address 0x4 - core index']
  #allocation1 [shape = 'u32[72,128]{1,0:T(1,128)}', space=vmem, size = 0x9000, scoped, tag = 'internal scratch']
  %s0 = inlined_call_operand.vmem [shape: f32[8,784], index: 0, kind: input, shape index: {}]
  %s1 = inlined_call_operand.vmem [shape: f32[784,128], index: 1, kind: input, shape index: {}]
  %s2 = inlined_call_operand.vmem [shape: f32[1,128], index: 2, kind: input, shape index: {}]
  %s3 = inlined_call_operand.vmem [shape: f32[8,128], index: 3, kind: output, shape index: {}]
  %s4 = sld [smem:[#allocation0]]
  $region22: #{one_layer_forward.1} parent=0
    _
  %s6 = ssub.s32 1, %s4
  %s7 = scalar_select 0, %s6, %s4
  // Predicated region
  $region2: #{one_layer_forward.1} parent=0 // pred_check
    _
  $region3: #{one_layer_forward.1} parent=0 // pred_check_branch
    %9 = sbr.rel (0) target = $region5
  $region4: #{one_layer_forward.1} parent=0 // pred_region
    _
  $region5: #{one_layer_forward.1} parent=0 // pred_fallthru
    _
  // Predicated region
  $region6: #{one_layer_forward.1} parent=0 // pred_check
    _
  $region7: #{one_layer_forward.1} parent=0 // pred_check_branch
    %11 = sbr.rel (0) target = $region9
  $region8: #{one_layer_forward.1} parent=0 // pred_region
    _
  $region9: #{one_layer_forward.1} parent=0 // pred_fallthru
    _
  // Predicated region
  $region10: #{one_layer_forward.1} parent=0 // pred_check
    _
  $region11: #{one_layer_forward.1} parent=0 // pred_check_branch
    %13 = sbr.rel (0) target = $region13
  $region12: #{one_layer_forward.1} parent=0 // pred_region
    _
  $region13: #{one_layer_forward.1} parent=0 // pred_fallthru
    _
  %v14 = vld [vmem:[%s0] sm:$0xff]
  %v15 = vld [vmem:[%s0 + $0x8] sm:$0xff]
  %v16 = vld [vmem:[%s0 + $0x10] sm:$0xff]
  %v17 = vld [vmem:[%s0 + $0x18] sm:$0xff]
  %v18 = vld [vmem:[%s0 + $0x20] sm:$0xff]
  %v19 = vld [vmem:[%s0 + $0x28] sm:$0xff]
  %v20 = vld [vmem:[%s0 + $0x30] sm:$0xff]
  %v21 = vld [vmem:[%s1] sm:$0xff]
  %v22 = vld [vmem:[%s1 + $0x8] sm:$0xff]
  %v23 = vld [vmem:[%s1 + $0x10] sm:$0xff]
  %v24 = vld [vmem:[%s1 + $0x18] sm:$0xff]
  %v25 = vld [vmem:[%s1 + $0x20] sm:$0xff]
  %v26 = vld [vmem:[%s1 + $0x28] sm:$0xff]
  %v27 = vld [vmem:[%s1 + $0x30] sm:$0xff]
  %v28 = vld [vmem:[%s1 + $0x38] sm:$0xff]
  %v29 = vld [vmem:[%s1 + $0x40] sm:$0xff]
  %v30 = vld [vmem:[%s1 + $0x48] sm:$0xff]
  %v31 = vld [vmem:[%s1 + $0x50] sm:$0xff]
  %v32 = vld [vmem:[%s1 + $0x58] sm:$0xff]
  %v33 = vld [vmem:[%s1 + $0x60] sm:$0xff]
  %v34 = vld [vmem:[%s1 + $0x68] sm:$0xff]
  %v35 = vld [vmem:[%s1 + $0x70] sm:$0xff]
  %v36 = vld [vmem:[%s1 + $0x78] sm:$0xff]
  %v37 = vld [vmem:[%s1 + $0x80] sm:$0xff]
  %v38 = vld [vmem:[%s1 + $0x88] sm:$0xff]
  %v39 = vld [vmem:[%s1 + $0x90] sm:$0xff]
  %v40 = vld [vmem:[%s1 + $0x98] sm:$0xff]
  %v41 = vld [vmem:[%s1 + $0xa0] sm:$0xff]
  %v42 = vld [vmem:[%s1 + $0xa8] sm:$0xff]
  %v43 = vld [vmem:[%s1 + $0xb0] sm:$0xff]
  %v44 = vld [vmem:[%s1 + $0xb8] sm:$0xff]
  %v45 = vld [vmem:[%s1 + $0xc0] sm:$0xff]
  %v46 = vld [vmem:[%s1 + $0xc8] sm:$0xff]
  %v47 = vld [vmem:[%s1 + $0xd0] sm:$0xff]
  %v48 = vld [vmem:[%s1 + $0xd8] sm:$0xff]
  %v49 = vld [vmem:[%s1 + $0xe0] sm:$0xff]
  %v50 = vld [vmem:[%s1 + $0xe8] sm:$0xff]
  %v51 = vld [vmem:[%s1 + $0xf0] sm:$0xff]
  %v52 = vld [vmem:[%s1 + $0xf8] sm:$0xff]
  %v53 = vld [vmem:[%s1 + $0x100] sm:$0xff]
  %v54 = vld [vmem:[%s1 + $0x108] sm:$0xff]
  %v55 = vld [vmem:[%s1 + $0x110] sm:$0xff]
  %v56 = vld [vmem:[%s1 + $0x118] sm:$0xff]
  %v57 = vld [vmem:[%s1 + $0x120] sm:$0xff]
  %v58 = vld [vmem:[%s1 + $0x128] sm:$0xff]
  %v59 = vld [vmem:[%s1 + $0x130] sm:$0xff]
  %v60 = vld [vmem:[%s1 + $0x138] sm:$0xff]
  %v61 = vld [vmem:[%s1 + $0x140] sm:$0xff]
  %v62 = vld [vmem:[%s1 + $0x148] sm:$0xff]
  %v63 = vld [vmem:[%s1 + $0x150] sm:$0xff]
  %v64 = vld [vmem:[%s1 + $0x158] sm:$0xff]
  %v65 = vld [vmem:[%s1 + $0x160] sm:$0xff]
  %v66 = vld [vmem:[%s1 + $0x168] sm:$0xff]
  %v67 = vld [vmem:[%s1 + $0x170] sm:$0xff]
  %v68 = vld [vmem:[%s1 + $0x178] sm:$0xff]
  %v69 = vld [vmem:[%s1 + $0x180] sm:$0xff]
  %v70 = vld [vmem:[%s1 + $0x188] sm:$0xff]
  %v71 = vld [vmem:[%s1 + $0x190] sm:$0xff]
  %v72 = vld [vmem:[%s1 + $0x198] sm:$0xff]
  %v73 = vld [vmem:[%s1 + $0x1a0] sm:$0xff]
  %v74 = vld [vmem:[%s1 + $0x1a8] sm:$0xff]
  %v75 = vld [vmem:[%s1 + $0x1b0] sm:$0xff]
  %v76 = vld [vmem:[%s1 + $0x1b8] sm:$0xff]
  %v77 = vld [vmem:[%s1 + $0x1c0] sm:$0xff]
  %v78 = vld [vmem:[%s1 + $0x1c8] sm:$0xff]
  %v79 = vld [vmem:[%s1 + $0x1d0] sm:$0xff]
  %v80 = vld [vmem:[%s1 + $0x1d8] sm:$0xff]
  %v81 = vld [vmem:[%s1 + $0x1e0] sm:$0xff]
  %v82 = vld [vmem:[%s1 + $0x1e8] sm:$0xff]
  %v83 = vld [vmem:[%s1 + $0x1f0] sm:$0xff]
  %v84 = vld [vmem:[%s1 + $0x1f8] sm:$0xff]
  %v85 = vld [vmem:[%s1 + $0x200] sm:$0xff]
  %v86 = vld [vmem:[%s1 + $0x208] sm:$0xff]
  %v87 = vld [vmem:[%s1 + $0x210] sm:$0xff]
  %v88 = vld [vmem:[%s1 + $0x218] sm:$0xff]
  %v89 = vld [vmem:[%s1 + $0x220] sm:$0xff]
  %v90 = vld [vmem:[%s1 + $0x228] sm:$0xff]
  %v91 = vld [vmem:[%s1 + $0x230] sm:$0xff]
  %v92 = vld [vmem:[%s1 + $0x238] sm:$0xff]
  %v93 = vld [vmem:[%s1 + $0x240] sm:$0xff]
  %v94 = vld [vmem:[%s1 + $0x248] sm:$0xff]
  %v95 = vld [vmem:[%s1 + $0x250] sm:$0xff]
  %v96 = vld [vmem:[%s1 + $0x258] sm:$0xff]
  %v97 = vld [vmem:[%s1 + $0x260] sm:$0xff]
  %v98 = vld [vmem:[%s1 + $0x268] sm:$0xff]
  %v99 = vld [vmem:[%s1 + $0x270] sm:$0xff]
  %v100 = vld [vmem:[%s1 + $0x278] sm:$0xff]
  %v101 = vld [vmem:[%s1 + $0x280] sm:$0xff]
  %v102 = vld [vmem:[%s1 + $0x288] sm:$0xff]
  %v103 = vld [vmem:[%s1 + $0x290] sm:$0xff]
  %v104 = vld [vmem:[%s1 + $0x298] sm:$0xff]
  %v105 = vld [vmem:[%s1 + $0x2a0] sm:$0xff]
  %v106 = vld [vmem:[%s1 + $0x2a8] sm:$0xff]
  %v107 = vld [vmem:[%s1 + $0x2b0] sm:$0xff]
  %v108 = vld [vmem:[%s1 + $0x2b8] sm:$0xff]
  %v109 = vld [vmem:[%s1 + $0x2c0] sm:$0xff]
  %v110 = vld [vmem:[%s1 + $0x2c8] sm:$0xff]
  %v111 = vld [vmem:[%s1 + $0x2d0] sm:$0xff]
  %v112 = vld [vmem:[%s1 + $0x2d8] sm:$0xff]
  %v113 = vld [vmem:[%s1 + $0x2e0] sm:$0xff]
  %v114 = vld [vmem:[%s1 + $0x2e8] sm:$0xff]
  %v115 = vld [vmem:[%s1 + $0x2f0] sm:$0xff]
  %v116 = vld [vmem:[%s1 + $0x2f8] sm:$0xff]
  %v117 = vld [vmem:[%s1 + $0x300] sm:$0xff]
  %v118 = vld [vmem:[%s1 + $0x308] sm:$0xff]
  %v119 = vld [vmem:[%s2] sm:$0x1]
  %v121 = vperm.slane %v119, 0
  %vm123 = vcmask 130048
  %v125 = vsel %vm123, %v20, 0
  %127 = vmatpush.msra.mxu0 %v36
  %128 = vmatpush.msra.mxu0 %v35
  %129 = vmatpush.msra.mxu0 %v34
  %130 = vmatpush.msra.mxu0 %v33
  %131 = vmatpush.msra.mxu0 %v32
  %132 = vmatpush.msra.mxu0 %v31
  %133 = vmatpush.msra.mxu0 %v30
  %134 = vmatpush.msra.mxu0 %v29
  %135 = vmatpush.msra.mxu0 %v28
  %136 = vmatpush.msra.mxu0 %v27
  %137 = vmatpush.msra.mxu0 %v26
  %138 = vmatpush.msra.mxu0 %v25
  %139 = vmatpush.msra.mxu0 %v24
  %140 = vmatpush.msra.mxu0 %v23
  %141 = vmatpush.msra.mxu0 %v22
  %142 = vmatpush.msra.mxu0 %v21
  %143 = vmatmul.f32.gmra.mxu0 %v14
  %v144 = vpop.f32.mrf.mxu0
  %v145 = vadd.f32 %v121, %v144
  %146 = vdwg.mxu0
  %147 = vmatpush.msra.mxu0 %v52
  %148 = vmatpush.msra.mxu0 %v51
  %149 = vmatpush.msra.mxu0 %v50
  %150 = vmatpush.msra.mxu0 %v49
  %151 = vmatpush.msra.mxu0 %v48
  %152 = vmatpush.msra.mxu0 %v47
  %153 = vmatpush.msra.mxu0 %v46
  %154 = vmatpush.msra.mxu0 %v45
  %155 = vmatpush.msra.mxu0 %v44
  %156 = vmatpush.msra.mxu0 %v43
  %157 = vmatpush.msra.mxu0 %v42
  %158 = vmatpush.msra.mxu0 %v41
  %159 = vmatpush.msra.mxu0 %v40
  %160 = vmatpush.msra.mxu0 %v39
  %161 = vmatpush.msra.mxu0 %v38
  %162 = vmatpush.msra.mxu0 %v37
  %163 = vmatmul.f32.gmra.mxu0 %v15
  %v164 = vpop.f32.mrf.mxu0
  %v165 = vadd.f32 %v145, %v164
  %166 = vdwg.mxu0
  %167 = vmatpush.msra.mxu0 %v68
  %168 = vmatpush.msra.mxu0 %v67
  %169 = vmatpush.msra.mxu0 %v66
  %170 = vmatpush.msra.mxu0 %v65
  %171 = vmatpush.msra.mxu0 %v64
  %172 = vmatpush.msra.mxu0 %v63
  %173 = vmatpush.msra.mxu0 %v62
  %174 = vmatpush.msra.mxu0 %v61
  %175 = vmatpush.msra.mxu0 %v60
  %176 = vmatpush.msra.mxu0 %v59
  %177 = vmatpush.msra.mxu0 %v58
  %178 = vmatpush.msra.mxu0 %v57
  %179 = vmatpush.msra.mxu0 %v56
  %180 = vmatpush.msra.mxu0 %v55
  %181 = vmatpush.msra.mxu0 %v54
  %182 = vmatpush.msra.mxu0 %v53
  %183 = vmatmul.f32.gmra.mxu0 %v16
  %v184 = vpop.f32.mrf.mxu0
  %v185 = vadd.f32 %v165, %v184
  %186 = vdwg.mxu0
  %187 = vmatpush.msra.mxu0 %v84
  %188 = vmatpush.msra.mxu0 %v83
  %189 = vmatpush.msra.mxu0 %v82
  %190 = vmatpush.msra.mxu0 %v81
  %191 = vmatpush.msra.mxu0 %v80
  %192 = vmatpush.msra.mxu0 %v79
  %193 = vmatpush.msra.mxu0 %v78
  %194 = vmatpush.msra.mxu0 %v77
  %195 = vmatpush.msra.mxu0 %v76
  %196 = vmatpush.msra.mxu0 %v75
  %197 = vmatpush.msra.mxu0 %v74
  %198 = vmatpush.msra.mxu0 %v73
  %199 = vmatpush.msra.mxu0 %v72
  %200 = vmatpush.msra.mxu0 %v71
  %201 = vmatpush.msra.mxu0 %v70
  %202 = vmatpush.msra.mxu0 %v69
  %203 = vmatmul.f32.gmra.mxu0 %v17
  %v204 = vpop.f32.mrf.mxu0
  %v205 = vadd.f32 %v185, %v204
  %206 = vdwg.mxu0
  %207 = vmatpush.msra.mxu0 %v100
  %208 = vmatpush.msra.mxu0 %v99
  %209 = vmatpush.msra.mxu0 %v98
  %210 = vmatpush.msra.mxu0 %v97
  %211 = vmatpush.msra.mxu0 %v96
  %212 = vmatpush.msra.mxu0 %v95
  %213 = vmatpush.msra.mxu0 %v94
  %214 = vmatpush.msra.mxu0 %v93
  %215 = vmatpush.msra.mxu0 %v92
  %216 = vmatpush.msra.mxu0 %v91
  %217 = vmatpush.msra.mxu0 %v90
  %218 = vmatpush.msra.mxu0 %v89
  %219 = vmatpush.msra.mxu0 %v88
  %220 = vmatpush.msra.mxu0 %v87
  %221 = vmatpush.msra.mxu0 %v86
  %222 = vmatpush.msra.mxu0 %v85
  %223 = vmatmul.f32.gmra.mxu0 %v18
  %v224 = vpop.f32.mrf.mxu0
  %v225 = vadd.f32 %v205, %v224
  %226 = vdwg.mxu0
  %227 = vmatpush.msra.mxu0 %v116
  %228 = vmatpush.msra.mxu0 %v115
  %229 = vmatpush.msra.mxu0 %v114
  %230 = vmatpush.msra.mxu0 %v113
  %231 = vmatpush.msra.mxu0 %v112
  %232 = vmatpush.msra.mxu0 %v111
  %233 = vmatpush.msra.mxu0 %v110
  %234 = vmatpush.msra.mxu0 %v109
  %235 = vmatpush.msra.mxu0 %v108
  %236 = vmatpush.msra.mxu0 %v107
  %237 = vmatpush.msra.mxu0 %v106
  %238 = vmatpush.msra.mxu0 %v105
  %239 = vmatpush.msra.mxu0 %v104
  %240 = vmatpush.msra.mxu0 %v103
  %241 = vmatpush.msra.mxu0 %v102
  %242 = vmatpush.msra.mxu0 %v101
  %243 = vmatmul.f32.gmra.mxu0 %v19
  %v244 = vpop.f32.mrf.mxu0
  %v245 = vadd.f32 %v225, %v244
  %246 = vdwg.mxu0
  %247 = vmatpush.msra.mxu0 0.0
  %248 = vmatpush.msra.mxu0 0.0
  %249 = vmatpush.msra.mxu0 0.0
  %250 = vmatpush.msra.mxu0 0.0
  %251 = vmatpush.msra.mxu0 0.0
  %252 = vmatpush.msra.mxu0 0.0
  %253 = vmatpush.msra.mxu0 0.0
  %254 = vmatpush.msra.mxu0 0.0
  %255 = vmatpush.msra.mxu0 0.0
  %256 = vmatpush.msra.mxu0 0.0
  %257 = vmatpush.msra.mxu0 0.0
  %258 = vmatpush.msra.mxu0 0.0
  %259 = vmatpush.msra.mxu0 0.0
  %260 = vmatpush.msra.mxu0 0.0
  %261 = vmatpush.msra.mxu0 %v118
  %262 = vmatpush.msra.mxu0 %v117
  %263 = vmatmul.f32.gmra.mxu0 %v125
  %v264 = vpop.f32.mrf.mxu0
  %v265 = vadd.f32 %v245, %v264
  %266 = vdwg.mxu0
  %v267 = vsub.f32 0.0, %v265
  %v268 = vmul.f32 %v267, 1.442695
  %v269 = vpow.pop %v268
  %v270 = vadd.f32 %v269, 1.0
  %v271 = vrcp.pop %v270
  %272 = vst [vmem:[%s3] sm:$0xff] %v271
  // Predicated region
  $region14: #{one_layer_forward.1} parent=0 // pred_check
    _
  $region15: #{one_layer_forward.1} parent=0 // pred_check_branch
    %274 = sbr.rel (0) target = $region17
  $region16: #{one_layer_forward.1} parent=0 // pred_region
    _
  $region17: #{one_layer_forward.1} parent=0 // pred_fallthru
    _
  // Predicated region
  $region18: #{one_layer_forward.1} parent=0 // pred_check
    _
  $region19: #{one_layer_forward.1} parent=0 // pred_check_branch
    %276 = sbr.rel (0) target = $region21
  $region20: #{one_layer_forward.1} parent=0 // pred_region
    _
  $region21: #{one_layer_forward.1} parent=0 // pred_fallthru
    _

</llo_original>
